<compile_context>
chip_gen: v5e
topology: v5e:2x2
jax: 0.10.0
libtpu: 0.0.40
codegen_flags: <defaults>
</compile_context>

<pallas_src>
import functools

import jax
import jax.numpy as jnp
from jax.experimental import pallas as pl
from jax.experimental.pallas import tpu as pltpu


# ----------------------------------------------------------------------------
# Fused Pallas kernel
# ----------------------------------------------------------------------------
def _stagate_fused_kernel(x_ref, mask_ref, w1_ref, att_src_ref, att_dst_ref,
                          w2_ref, o_ref, *, mxu_dtype):
    f32 = jnp.float32

    def mm(a, b):                      # a @ b on the MXU, f32 accumulation
        return jnp.dot(a.astype(mxu_dtype), b.astype(mxu_dtype),
                       preferred_element_type=f32)

    def mm_nt(a, b):                   # a @ b.T without materializing b.T
        return jax.lax.dot_general(a.astype(mxu_dtype), b.astype(mxu_dtype),
                                   dimension_numbers=(((1,), (1,)), ((), ())),
                                   preferred_element_type=f32)

    x = x_ref[...]
    w1 = w1_ref[...]
    w2 = w2_ref[...]
    valid = mask_ref[...] > 0          # bf16 adjacency mask -> bool [N, N]

    # ---- conv1 linear part: h1_pre = x @ W1 ----
    h1_pre = mm(x, w1)                                               # [N, nh]

    # ---- attention logits (computed once; conv3 reuses them -- tied attention)
    # dst logit stays column-oriented: cheap VPU multiply + row reduce.
    a_dst = jnp.sum(h1_pre * att_dst_ref[...], axis=-1, keepdims=True)   # [N,1]
    # src logit must sit on the *lane* axis of the [N,N] score matrix; a tiny NT
    # matmul yields it lane-dense as [1,N] with no transpose op and no extra call.
    a_src = jax.lax.dot_general(att_src_ref[...], h1_pre,
                                dimension_numbers=(((1,), (1,)), ((), ())),
                                preferred_element_type=f32)              # [1,N]

    def gat_aggregate(h):
        # score[i,j] = sigmoid(a_src[j] + a_dst[i]) in (0,1) => exp() can never
        # overflow, so no max-stabilization pass is needed.
        scores = jax.nn.sigmoid(a_dst + a_src)                       # [N, N]
        e = jnp.where(valid, jnp.exp(scores), 0.0)                   # masked
        denom = jnp.sum(e, axis=-1, keepdims=True)                   # [N, 1]
        # Any row with >=1 incoming edge has denom > 1, so the clamp only shields
        # edge-less rows (whose e-row is all zero -> attention row stays 0).
        inv = pl.reciprocal(jnp.maximum(denom, 1e-20), approx=True)  # EUP slot
        att = e * inv                                                # [N, N]
        out = mm(att, h)                                             # aggregate
        # F.elu (alpha=1); minimum() keeps the discarded exp branch finite.
        return jnp.where(out > 0.0, out, jnp.exp(jnp.minimum(out, 0.0)) - 1.0)

    h1 = gat_aggregate(h1_pre)         # elu(conv1(x))                [N, nh]
    h2 = mm(h1, w2)                    # conv2, attention=False       [N, out]
    h3_pre = mm_nt(h2, w2)             # h2 @ W2.T                    [N, nh]
    h3 = gat_aggregate(h3_pre)         # elu(conv3), tied attention   [N, nh]
    h4 = mm_nt(h3, w1)                 # conv4: h3 @ W1.T             [N, in]

    # Single lane-dense store:  [ h2 | h4 | zero pad ]  ->  [N, PAD], PAD % 128 == 0
    n = h2.shape[0]
    pad_cols = o_ref.shape[1] - h2.shape[1] - h4.shape[1]
    parts = [h2, h4]
    if pad_cols:
        parts.append(jnp.zeros((n, pad_cols), f32))
    o_ref[...] = jnp.concatenate(parts, axis=-1)


# ----------------------------------------------------------------------------
# Wrapper
# ----------------------------------------------------------------------------
def stagate_forward(x, adj_mask, params, *, mxu_dtype=jnp.float32):
    """Returns (h2, h4) exactly as Stagate.forward, from one fused Pallas kernel."""
    N, in_dim = x.shape
    W1 = params["W1"]                    # [in_dim, num_hidden]
    W2 = params["W2"]                    # [num_hidden, out_dim]
    att_src = params["att1_src"]         # [1, num_hidden]
    att_dst = params["att1_dst"]         # [1, num_hidden]
    nh = W1.shape[1]
    out_dim = W2.shape[1]

    # Lane-dense output slab width (multiple of 128).
    slab_w = ((out_dim + in_dim + 127) // 128) * 128

    kernel = functools.partial(_stagate_fused_kernel, mxu_dtype=mxu_dtype)
    slab = pl.pallas_call(
        kernel,
        out_shape=jax.ShapeDtypeStruct((N, slab_w), jnp.float32),
        grid=(1,),
        in_specs=[
            pl.BlockSpec((N, in_dim), lambda i: (0, 0)),   # x
            pl.BlockSpec((N, N), lambda i: (0, 0)),        # adjacency mask (bf16)
            pl.BlockSpec((in_dim, nh), lambda i: (0, 0)),  # W1
            pl.BlockSpec((1, nh), lambda i: (0, 0)),       # att_src
            pl.BlockSpec((1, nh), lambda i: (0, 0)),       # att_dst
            pl.BlockSpec((nh, out_dim), lambda i: (0, 0)), # W2
        ],
        out_specs=pl.BlockSpec((N, slab_w), lambda i: (0, 0)),
        compiler_params=pltpu.CompilerParams(
            dimension_semantics=("arbitrary",)),
    )(x, adj_mask, W1, att_src, att_dst, W2)

    h2 = slab[:, :out_dim]
    h4 = slab[:, out_dim:out_dim + in_dim]
    return h2, h4


# ----------------------------------------------------------------------------
# Pure-JAX reference (for correctness check only)
# ----------------------------------------------------------------------------
def stagate_forward_ref(x, adj_mask, params):
    W1, W2 = params["W1"], params["W2"]
    att_src, att_dst = params["att1_src"], params["att1_dst"]
    valid = adj_mask.astype(jnp.float32) > 0
    hi = jax.lax.Precision.HIGHEST

    def mm(a, b):
        return jnp.dot(a, b, precision=hi)

    h1_pre = mm(x, W1)
    a_src = jnp.sum(h1_pre * att_src, axis=-1)   # [N]
    a_dst = jnp.sum(h1_pre * att_dst, axis=-1)   # [N]

    def gat(h):
        scores = jax.nn.sigmoid(a_dst[:, None] + a_src[None, :])
        e = jnp.where(valid, jnp.exp(scores), 0.0)
        att = e / jnp.maximum(jnp.sum(e, axis=-1, keepdims=True), 1e-20)
        out = mm(att, h)
        return jnp.where(out > 0.0, out, jnp.exp(jnp.minimum(out, 0.0)) - 1.0)

    h1 = gat(h1_pre)
    h2 = mm(h1, W2)
    h3 = gat(mm(h2, W2.T))
    h4 = mm(h3, W1.T)
    return h2, h4


# ----------------------------------------------------------------------------
# Param init (matches the PyTorch xavier_normal_(gain=1.414) flavor)
# ----------------------------------------------------------------------------
def xavier_normal(key, shape, gain=1.414):
    fan_in, fan_out = shape[0], shape[1]
    std = gain * (2.0 / (fan_in + fan_out)) ** 0.5
    return std * jax.random.normal(key, shape, dtype=jnp.float32)


def init_params(key, in_dim, num_hidden, out_dim):
    k1, k2, k3, k4 = jax.random.split(key, 4)
    return {
        "W1": xavier_normal(k1, (in_dim, num_hidden)),       # conv1.lin_src
        "att1_src": xavier_normal(k2, (1, num_hidden)),      # conv1.att_src
        "att1_dst": xavier_normal(k3, (1, num_hidden)),      # conv1.att_dst
        "W2": xavier_normal(k4, (num_hidden, out_dim)),      # conv2.lin_src
        # conv3/conv4 weights are W2.T / W1.T (set in forward); their attention
        # params are unused (tied attention / attention=False).
    }


# ----------------------------------------------------------------------------
# Main
# ----------------------------------------------------------------------------
if __name__ == "__main__":
    key = jax.random.PRNGKey(0)
    k_x, k_p = jax.random.split(key)

    N = 16          # number of nodes (spots)
    in_dim = 32     # input gene features
    num_hidden = 16
    out_dim = 8     # latent STAGATE dimension

    # Node features [N, in_dim]
    x = jax.random.normal(k_x, (N, in_dim), dtype=jnp.float32)

    # Deterministic ring graph edge_index (src -> dst), densified to a bf16 mask
    # A[dst, src] = 1 iff edge src -> dst (self edges included explicitly).
    idx = jnp.arange(N)
    src = jnp.concatenate([idx, (idx + 1) % N, idx])
    dst = jnp.concatenate([(idx + 1) % N, idx, idx])
    adj_mask = jnp.zeros((N, N), dtype=jnp.bfloat16).at[dst, src].set(1.0)

    params = init_params(k_p, in_dim, num_hidden, out_dim)

    fwd = jax.jit(stagate_forward)
    h2, h4 = fwd(x, adj_mask, params)
    jax.block_until_ready((h2, h4))

    # Shape / dtype / sanity checks
    assert h2.shape == (N, out_dim) and h2.dtype == jnp.float32
    assert h4.shape == (N, in_dim) and h4.dtype == jnp.float32
    assert bool(jnp.all(jnp.isfinite(h2))) and bool(jnp.all(jnp.isfinite(h4)))

    # Numerical parity against a pure-JAX reference (loose tol: approx reciprocal
    # + MXU f32 pass accumulation vs XLA HIGHEST precision).
    h2_ref, h4_ref = stagate_forward_ref(x, adj_mask, params)
    assert bool(jnp.allclose(h2, h2_ref, rtol=2e-2, atol=2e-2))
    assert bool(jnp.allclose(h4, h4_ref, rtol=2e-2, atol=2e-2))

    print("KERNEL_OK")
</pallas_src>

<mosaic_0001>
module attributes {stable_mosaic.version = 11 : i64} {
  func.func @_stagate_fused_kernel(%arg0: i32, %arg1: memref<16x32xf32, #tpu.memory_space<vmem>>, %arg2: memref<16x16xbf16, #tpu.memory_space<vmem>>, %arg3: memref<32x16xf32, #tpu.memory_space<vmem>>, %arg4: memref<1x16xf32, #tpu.memory_space<vmem>>, %arg5: memref<1x16xf32, #tpu.memory_space<vmem>>, %arg6: memref<16x8xf32, #tpu.memory_space<vmem>>, %arg7: memref<16x128xf32, #tpu.memory_space<vmem>>) attributes {dimension_semantics = [#tpu.dimension_semantics<arbitrary>], iteration_bounds = array<i64: 1>, scalar_prefetch = 0 : i64, scratch_operands = 0 : i64, tpu.core_type = #tpu.core_type<tc>, window_params = [{pipeline_mode = #tpu.pipeline_mode<synchronous>, transform_indices = @transform_0, window_bounds = array<i64: 16, 32>}, {pipeline_mode = #tpu.pipeline_mode<synchronous>, transform_indices = @transform_1, window_bounds = array<i64: 16, 16>}, {pipeline_mode = #tpu.pipeline_mode<synchronous>, transform_indices = @transform_2, window_bounds = array<i64: 32, 16>}, {pipeline_mode = #tpu.pipeline_mode<synchronous>, transform_indices = @transform_3, window_bounds = array<i64: 1, 16>}, {pipeline_mode = #tpu.pipeline_mode<synchronous>, transform_indices = @transform_4, window_bounds = array<i64: 1, 16>}, {pipeline_mode = #tpu.pipeline_mode<synchronous>, transform_indices = @transform_5, window_bounds = array<i64: 16, 8>}, {pipeline_mode = #tpu.pipeline_mode<synchronous>, transform_indices = @transform_6, window_bounds = array<i64: 16, 128>}]} {
    %c0 = arith.constant 0 : index
    %c0_0 = arith.constant 0 : index
    %0 = vector.load %arg1[%c0, %c0_0] : memref<16x32xf32, #tpu.memory_space<vmem>>, vector<16x32xf32>
    %c0_1 = arith.constant 0 : index
    %c0_2 = arith.constant 0 : index
    %1 = vector.load %arg3[%c0_1, %c0_2] : memref<32x16xf32, #tpu.memory_space<vmem>>, vector<32x16xf32>
    %c0_3 = arith.constant 0 : index
    %c0_4 = arith.constant 0 : index
    %2 = vector.load %arg6[%c0_3, %c0_4] : memref<16x8xf32, #tpu.memory_space<vmem>>, vector<16x8xf32>
    %c0_5 = arith.constant 0 : index
    %c0_6 = arith.constant 0 : index
    %3 = vector.load %arg2[%c0_5, %c0_6] : memref<16x16xbf16, #tpu.memory_space<vmem>>, vector<16x16xbf16>
    %cst = arith.constant 0.000000e+00 : bf16
    %4 = vector.broadcast %cst : bf16 to vector<16x16xbf16>
    %5 = arith.cmpf ogt, %3, %4 : vector<16x16xbf16>
    %cst_7 = arith.constant dense<0.000000e+00> : vector<16x16xf32>
    %6 = tpu.matmul %0, %1, %cst_7 {dimension_numbers = #tpu.dot_dimension_numbers<[1], [0], [0], [1], [0, 0, 1, 1], [], []>} : vector<16x32xf32>, vector<32x16xf32>, vector<16x16xf32> -> vector<16x16xf32>
    %c0_8 = arith.constant 0 : index
    %c0_9 = arith.constant 0 : index
    %7 = vector.load %arg5[%c0_8, %c0_9] : memref<1x16xf32, #tpu.memory_space<vmem>>, vector<1x16xf32>
    %8 = vector.broadcast %7 : vector<1x16xf32> to vector<16x16xf32>
    %9 = arith.mulf %6, %8 : vector<16x16xf32>
    %cst_10 = arith.constant dense<0.000000e+00> : vector<16xf32>
    %10 = vector.multi_reduction <add>, %9, %cst_10 [1] : vector<16x16xf32> to vector<16xf32>
    %11 = vector.shape_cast %10 : vector<16xf32> to vector<16x1xf32>
    %c0_11 = arith.constant 0 : index
    %c0_12 = arith.constant 0 : index
    %12 = vector.load %arg4[%c0_11, %c0_12] : memref<1x16xf32, #tpu.memory_space<vmem>>, vector<1x16xf32>
    %cst_13 = arith.constant dense<0.000000e+00> : vector<1x16xf32>
    %13 = tpu.matmul %12, %6, %cst_13 {dimension_numbers = #tpu.dot_dimension_numbers<[1], [1], [0], [0], [0, 0, 1, 0], [], []>} : vector<1x16xf32>, vector<16x16xf32>, vector<1x16xf32> -> vector<1x16xf32>
    %14 = vector.broadcast %11 : vector<16x1xf32> to vector<16x16xf32>
    %15 = vector.broadcast %13 : vector<1x16xf32> to vector<16x16xf32>
    %16 = arith.addf %14, %15 : vector<16x16xf32>
    %17 = arith.negf %16 : vector<16x16xf32>
    %18 = math.exp %17 : vector<16x16xf32>
    %cst_14 = arith.constant 1.000000e+00 : f32
    %19 = vector.broadcast %cst_14 : f32 to vector<16x16xf32>
    %20 = arith.addf %19, %18 : vector<16x16xf32>
    %21 = arith.divf %19, %20 : vector<16x16xf32>
    %22 = math.exp %21 : vector<16x16xf32>
    %cst_15 = arith.constant 0.000000e+00 : f32
    %23 = vector.broadcast %cst_15 : f32 to vector<16x16xf32>
    %24 = arith.select %5, %22, %23 : vector<16x16xi1>, vector<16x16xf32>
    %cst_16 = arith.constant dense<0.000000e+00> : vector<16xf32>
    %25 = vector.multi_reduction <add>, %24, %cst_16 [1] : vector<16x16xf32> to vector<16xf32>
    %26 = vector.shape_cast %25 : vector<16xf32> to vector<16x1xf32>
    %cst_17 = arith.constant 9.99999968E-21 : f32
    %27 = vector.broadcast %cst_17 : f32 to vector<16x1xf32>
    %28 = arith.maximumf %26, %27 : vector<16x1xf32>
    %29 = tpu.reciprocal %28 {approx = true} : vector<16x1xf32> -> vector<16x1xf32>
    %30 = vector.broadcast %29 : vector<16x1xf32> to vector<16x16xf32>
    %31 = arith.mulf %24, %30 : vector<16x16xf32>
    %cst_18 = arith.constant dense<0.000000e+00> : vector<16x16xf32>
    %32 = tpu.matmul %31, %6, %cst_18 {dimension_numbers = #tpu.dot_dimension_numbers<[1], [0], [0], [1], [0, 0, 1, 1], [], []>} : vector<16x16xf32>, vector<16x16xf32>, vector<16x16xf32> -> vector<16x16xf32>
    %cst_19 = arith.constant 0.000000e+00 : f32
    %33 = vector.broadcast %cst_19 : f32 to vector<16x16xf32>
    %34 = arith.cmpf ogt, %32, %33 : vector<16x16xf32>
    %cst_20 = arith.constant 0.000000e+00 : f32
    %35 = vector.broadcast %cst_20 : f32 to vector<16x16xf32>
    %36 = arith.minimumf %32, %35 : vector<16x16xf32>
    %37 = math.exp %36 : vector<16x16xf32>
    %cst_21 = arith.constant 1.000000e+00 : f32
    %38 = vector.broadcast %cst_21 : f32 to vector<16x16xf32>
    %39 = arith.subf %37, %38 : vector<16x16xf32>
    %40 = arith.select %34, %32, %39 : vector<16x16xi1>, vector<16x16xf32>
    %cst_22 = arith.constant dense<0.000000e+00> : vector<16x8xf32>
    %41 = tpu.matmul %40, %2, %cst_22 {dimension_numbers = #tpu.dot_dimension_numbers<[1], [0], [0], [1], [0, 0, 1, 1], [], []>} : vector<16x16xf32>, vector<16x8xf32>, vector<16x8xf32> -> vector<16x8xf32>
    %cst_23 = arith.constant dense<0.000000e+00> : vector<16x16xf32>
    %42 = tpu.matmul %41, %2, %cst_23 {dimension_numbers = #tpu.dot_dimension_numbers<[1], [1], [0], [0], [0, 0, 1, 0], [], []>} : vector<16x8xf32>, vector<16x8xf32>, vector<16x16xf32> -> vector<16x16xf32>
    %43 = vector.broadcast %11 : vector<16x1xf32> to vector<16x16xf32>
    %44 = vector.broadcast %13 : vector<1x16xf32> to vector<16x16xf32>
    %45 = arith.addf %43, %44 : vector<16x16xf32>
    %46 = arith.negf %45 : vector<16x16xf32>
    %47 = math.exp %46 : vector<16x16xf32>
    %cst_24 = arith.constant 1.000000e+00 : f32
    %48 = vector.broadcast %cst_24 : f32 to vector<16x16xf32>
    %49 = arith.addf %48, %47 : vector<16x16xf32>
    %50 = arith.divf %48, %49 : vector<16x16xf32>
    %51 = math.exp %50 : vector<16x16xf32>
    %cst_25 = arith.constant 0.000000e+00 : f32
    %52 = vector.broadcast %cst_25 : f32 to vector<16x16xf32>
    %53 = arith.select %5, %51, %52 : vector<16x16xi1>, vector<16x16xf32>
    %cst_26 = arith.constant dense<0.000000e+00> : vector<16xf32>
    %54 = vector.multi_reduction <add>, %53, %cst_26 [1] : vector<16x16xf32> to vector<16xf32>
    %55 = vector.shape_cast %54 : vector<16xf32> to vector<16x1xf32>
    %cst_27 = arith.constant 9.99999968E-21 : f32
    %56 = vector.broadcast %cst_27 : f32 to vector<16x1xf32>
    %57 = arith.maximumf %55, %56 : vector<16x1xf32>
    %58 = tpu.reciprocal %57 {approx = true} : vector<16x1xf32> -> vector<16x1xf32>
    %59 = vector.broadcast %58 : vector<16x1xf32> to vector<16x16xf32>
    %60 = arith.mulf %53, %59 : vector<16x16xf32>
    %cst_28 = arith.constant dense<0.000000e+00> : vector<16x16xf32>
    %61 = tpu.matmul %60, %42, %cst_28 {dimension_numbers = #tpu.dot_dimension_numbers<[1], [0], [0], [1], [0, 0, 1, 1], [], []>} : vector<16x16xf32>, vector<16x16xf32>, vector<16x16xf32> -> vector<16x16xf32>
    %cst_29 = arith.constant 0.000000e+00 : f32
    %62 = vector.broadcast %cst_29 : f32 to vector<16x16xf32>
    %63 = arith.cmpf ogt, %61, %62 : vector<16x16xf32>
    %cst_30 = arith.constant 0.000000e+00 : f32
    %64 = vector.broadcast %cst_30 : f32 to vector<16x16xf32>
    %65 = arith.minimumf %61, %64 : vector<16x16xf32>
    %66 = math.exp %65 : vector<16x16xf32>
    %cst_31 = arith.constant 1.000000e+00 : f32
    %67 = vector.broadcast %cst_31 : f32 to vector<16x16xf32>
    %68 = arith.subf %66, %67 : vector<16x16xf32>
    %69 = arith.select %63, %61, %68 : vector<16x16xi1>, vector<16x16xf32>
    %cst_32 = arith.constant dense<0.000000e+00> : vector<16x32xf32>
    %70 = tpu.matmul %69, %1, %cst_32 {dimension_numbers = #tpu.dot_dimension_numbers<[1], [1], [0], [0], [0, 0, 1, 0], [], []>} : vector<16x16xf32>, vector<32x16xf32>, vector<16x32xf32> -> vector<16x32xf32>
    %cst_33 = arith.constant 0.000000e+00 : f32
    %71 = vector.broadcast %cst_33 : f32 to vector<16x88xf32>
    %72 = tpu.concatenate %41, %70, %71 in 1 : vector<16x8xf32>, vector<16x32xf32>, vector<16x88xf32> -> vector<16x128xf32>
    %c0_34 = arith.constant 0 : index
    %c0_35 = arith.constant 0 : index
    %73 = vector.load %arg7[%c0_34, %c0_35] : memref<16x128xf32, #tpu.memory_space<vmem>>, vector<16x128xf32>
    tpu.vector_store %arg7[%c0_34, %c0_35], %72 {strides = array<i32>} : memref<16x128xf32, #tpu.memory_space<vmem>>, vector<16x128xf32>,
    return
  }
  func.func @transform_0(%arg0: i32) -> (i32, i32) {
    %c0_i32 = arith.constant 0 : i32
    %c0_i32_0 = arith.constant 0 : i32
    %c0_i32_1 = arith.constant 0 : i32
    return %c0_i32, %c0_i32_0 : i32, i32
  }
  func.func @transform_1(%arg0: i32) -> (i32, i32) {
    %c0_i32 = arith.constant 0 : i32
    %c0_i32_0 = arith.constant 0 : i32
    %c0_i32_1 = arith.constant 0 : i32
    return %c0_i32, %c0_i32_0 : i32, i32
  }
  func.func @transform_2(%arg0: i32) -> (i32, i32) {
    %c0_i32 = arith.constant 0 : i32
    %c0_i32_0 = arith.constant 0 : i32
    %c0_i32_1 = arith.constant 0 : i32
    return %c0_i32, %c0_i32_0 : i32, i32
  }
  func.func @transform_3(%arg0: i32) -> (i32, i32) {
    %c0_i32 = arith.constant 0 : i32
    %c0_i32_0 = arith.constant 0 : i32
    %c0_i32_1 = arith.constant 0 : i32
    return %c0_i32, %c0_i32_0 : i32, i32
  }
  func.func @transform_4(%arg0: i32) -> (i32, i32) {
    %c0_i32 = arith.constant 0 : i32
    %c0_i32_0 = arith.constant 0 : i32
    %c0_i32_1 = arith.constant 0 : i32
    return %c0_i32, %c0_i32_0 : i32, i32
  }
  func.func @transform_5(%arg0: i32) -> (i32, i32) {
    %c0_i32 = arith.constant 0 : i32
    %c0_i32_0 = arith.constant 0 : i32
    %c0_i32_1 = arith.constant 0 : i32
    return %c0_i32, %c0_i32_0 : i32, i32
  }
  func.func @transform_6(%arg0: i32) -> (i32, i32) {
    %c0_i32 = arith.constant 0 : i32
    %c0_i32_0 = arith.constant 0 : i32
    %c0_i32_1 = arith.constant 0 : i32
    return %c0_i32, %c0_i32_0 : i32, i32
  }
}

</mosaic_0001>

<llo_original>
// kernel: stagate_forward.1
$region0: #{stagate_forward.1}
  #allocation0 [shape = 'u32[]', space=smem, size = 0x4, offset = 0x4, fixed_abs, tag = 'smem constant byte address 0x4 - core index']
  #allocation1 [shape = 'u32[72,128]{1,0:T(1,128)}', space=vmem, size = 0x9000, scoped, tag = 'internal scratch']
  %s0 = inlined_call_operand.vmem [shape: f32[16,32], index: 0, kind: input, shape index: {}]
  %s1 = inlined_call_operand.vmem [shape: bf16[16,16], index: 1, kind: input, shape index: {}]
  %s2 = inlined_call_operand.vmem [shape: f32[32,16], index: 2, kind: input, shape index: {}]
  %s3 = inlined_call_operand.vmem [shape: f32[1,16], index: 3, kind: input, shape index: {}]
  %s4 = inlined_call_operand.vmem [shape: f32[1,16], index: 4, kind: input, shape index: {}]
  %s5 = inlined_call_operand.vmem [shape: f32[16,8], index: 5, kind: input, shape index: {}]
  %s6 = inlined_call_operand.vmem [shape: f32[16,128], index: 6, kind: output, shape index: {}]
  %s7 = sld [smem:[#allocation0]]
  $region34: #{stagate_forward.1} parent=0
    _
  %s9 = ssub.s32 1, %s7
  %s10 = scalar_select 0, %s9, %s7
  // Predicated region
  $region2: #{stagate_forward.1} parent=0 // pred_check
    _
  $region3: #{stagate_forward.1} parent=0 // pred_check_branch
    %12 = sbr.rel (0) target = $region5
  $region4: #{stagate_forward.1} parent=0 // pred_region
    _
  $region5: #{stagate_forward.1} parent=0 // pred_fallthru
    _
  // Predicated region
  $region6: #{stagate_forward.1} parent=0 // pred_check
    _
  $region7: #{stagate_forward.1} parent=0 // pred_check_branch
    %14 = sbr.rel (0) target = $region9
  $region8: #{stagate_forward.1} parent=0 // pred_region
    _
  $region9: #{stagate_forward.1} parent=0 // pred_fallthru
    _
  // Predicated region
  $region10: #{stagate_forward.1} parent=0 // pred_check
    _
  $region11: #{stagate_forward.1} parent=0 // pred_check_branch
    %16 = sbr.rel (0) target = $region13
  $region12: #{stagate_forward.1} parent=0 // pred_region
    _
  $region13: #{stagate_forward.1} parent=0 // pred_fallthru
    _
  // Predicated region
  $region14: #{stagate_forward.1} parent=0 // pred_check
    _
  $region15: #{stagate_forward.1} parent=0 // pred_check_branch
    %18 = sbr.rel (0) target = $region17
  $region16: #{stagate_forward.1} parent=0 // pred_region
    _
  $region17: #{stagate_forward.1} parent=0 // pred_fallthru
    _
  // Predicated region
  $region18: #{stagate_forward.1} parent=0 // pred_check
    _
  $region19: #{stagate_forward.1} parent=0 // pred_check_branch
    %20 = sbr.rel (0) target = $region21
  $region20: #{stagate_forward.1} parent=0 // pred_region
    _
  $region21: #{stagate_forward.1} parent=0 // pred_fallthru
    _
  // Predicated region
  $region22: #{stagate_forward.1} parent=0 // pred_check
    _
  $region23: #{stagate_forward.1} parent=0 // pred_check_branch
    %22 = sbr.rel (0) target = $region25
  $region24: #{stagate_forward.1} parent=0 // pred_region
    _
  $region25: #{stagate_forward.1} parent=0 // pred_fallthru
    _
  %v23 = vld [vmem:[%s0] sm:$0xff]
  %v24 = vld [vmem:[%s0 + $0x8] sm:$0xff]
  %v25 = vld [vmem:[%s2] sm:$0xff]
  %v26 = vld [vmem:[%s2 + $0x8] sm:$0xff]
  %v27 = vld [vmem:[%s2 + $0x10] sm:$0xff]
  %v28 = vld [vmem:[%s2 + $0x18] sm:$0xff]
  %v29 = vld [vmem:[%s5] sm:$0xff]
  %v30 = vld [vmem:[%s5 + $0x8] sm:$0xff]
  %v31 = vld [vmem:[%s1] sm:$0xf]
  %v32 = vld [vmem:[%s1 + $0x4] sm:$0xf]
  %v33 = vunpack.c.l.bf16 %v31
  %v34 = vunpack.c.l.bf16 %v32
  %vm35 = vcmp.gt.f32.partialorder %v33, 0.0
  %vm36 = vcmp.gt.f32.partialorder %v34, 0.0
  %vm37 = vcmask 261120
  %v39 = vsel %vm37, %v23, 0
  %v42 = vsel %vm37, %v24, 0
  %44 = vmatpush.msra.mxu0 0.0
  %45 = vmatpush.msra.mxu0 0.0
  %46 = vmatpush.msra.mxu0 0.0
  %47 = vmatpush.msra.mxu0 0.0
  %48 = vmatpush.msra.mxu0 0.0
  %49 = vmatpush.msra.mxu0 0.0
  %50 = vmatpush.msra.mxu0 0.0
  %51 = vmatpush.msra.mxu0 0.0
  %52 = vmatpush.msra.mxu0 0.0
  %53 = vmatpush.msra.mxu0 0.0
  %54 = vmatpush.msra.mxu0 0.0
  %55 = vmatpush.msra.mxu0 0.0
  %56 = vmatpush.msra.mxu0 %v28
  %57 = vmatpush.msra.mxu0 %v27
  %58 = vmatpush.msra.mxu0 %v26
  %59 = vmatpush.msra.mxu0 %v25
  %60 = vmatmul.f32.gmra.mxu0 %v39
  %v61 = vpop.f32.mrf.mxu0
  %v62 = vadd.f32 0.0, %v61
  %63 = vmatmul.f32.gmra.mxu0 %v42
  %v64 = vpop.f32.mrf.mxu0
  %v65 = vadd.f32 0.0, %v64
  %66 = vdwg.mxu0
  %v67 = vld [vmem:[%s4] sm:$0x1]
  %v69 = vperm.slane %v67, 0
  %v71 = vmul.f32 %v62, %v69
  %v72 = vmul.f32 %v65, %v69
  %vm73 = vcmask 130048
  %v74 = vsel %vm73, %v71, 0.0
  %75 = vadd.xlane.f32.xlu0 %v74
  %v76 = vpop.xlane.xlu0 %75
  %v77 = vsel %vm73, %v72, 0.0
  %78 = vadd.xlane.f32.xlu0 %v77
  %v79 = vpop.xlane.xlu0 %78
  %v80 = vld [vmem:[%s3] sm:$0x1]
  %v82 = vsel %vm73, %v80, 0
  %v85 = vsel %vm73, %v62, 0
  %v88 = vsel %vm73, %v65, 0
  %90 = vmatpush.xpose.msra.mxu0 0.0
  %91 = vmatpush.xpose.msra.mxu0 0.0
  %92 = vmatpush.xpose.msra.mxu0 0.0
  %93 = vmatpush.xpose.msra.mxu0 0.0
  %94 = vmatpush.xpose.msra.mxu0 0.0
  %95 = vmatpush.xpose.msra.mxu0 0.0
  %96 = vmatpush.xpose.msra.mxu0 0.0
  %97 = vmatpush.xpose.msra.mxu0 0.0
  %98 = vmatpush.xpose.msra.mxu0 0.0
  %99 = vmatpush.xpose.msra.mxu0 0.0
  %100 = vmatpush.xpose.msra.mxu0 0.0
  %101 = vmatpush.xpose.msra.mxu0 0.0
  %102 = vmatpush.xpose.msra.mxu0 0.0
  %103 = vmatpush.xpose.msra.mxu0 0.0
  %104 = vmatpush.xpose.msra.mxu0 %v88
  %105 = vmatpush.xpose.msra.mxu0 %v85
  %106 = vmatmul.f32.gmra.mxu0 %v82
  %v107 = vpop.f32.mrf.mxu0
  %v108 = vadd.f32 0.0, %v107
  %109 = vdwg.mxu0
  %v110 = vperm.slane %v108, 0
  %v111 = vadd.f32 %v76, %v110
  %v112 = vadd.f32 %v79, %v110
  %v113 = vxor.u32 %v111, 2147483648
  %v114 = vxor.u32 %v112, 2147483648
  %v115 = vmul.f32 %v113, 1.442695
  %v116 = vpow.pop %v115
  %v117 = vmul.f32 %v114, 1.442695
  %v118 = vpow.pop %v117
  %v119 = vadd.f32 %v116, 1.0
  %v120 = vadd.f32 %v118, 1.0
  %v121 = vrcp.pop %v119
  %v122 = vmul.f32 %v119, %v121
  %v123 = vsub.f32 1.0, %v122
  %v124 = vmul.f32 %v121, %v123
  %v125 = vadd.f32 %v121, %v124
  %vm126 = vweird.f32 %v119
  %vm127 = vweird.f32 %v121
  %vm128 = vmor %vm126, %vm127
  %v129 = vsel %vm128, %v121, %v125
  %v130 = vand.u32 2147483647, %v119
  %vm131 = vcmp.eq.f32.partialorder %v130, 8.507059e+37
  %v132 = vand.u32 %v119, 2147483648
  %v133 = vor.u32 1.1754944e-38, %v132
  %v134 = vsel %vm131, %v133, %v129
  %v135 = vmul.f32 1.0, %v134
  %v136 = vrcp.pop %v120
  %v137 = vmul.f32 %v120, %v136
  %v138 = vsub.f32 1.0, %v137
  %v139 = vmul.f32 %v136, %v138
  %v140 = vadd.f32 %v136, %v139
  %vm141 = vweird.f32 %v120
  %vm142 = vweird.f32 %v136
  %vm143 = vmor %vm141, %vm142
  %v144 = vsel %vm143, %v136, %v140
  %v145 = vand.u32 2147483647, %v120
  %vm146 = vcmp.eq.f32.partialorder %v145, 8.507059e+37
  %v147 = vand.u32 %v120, 2147483648
  %v148 = vor.u32 1.1754944e-38, %v147
  %v149 = vsel %vm146, %v148, %v144
  %v150 = vmul.f32 1.0, %v149
  %v151 = vmul.f32 %v135, 1.442695
  %v152 = vpow.pop %v151
  %v153 = vmul.f32 %v150, 1.442695
  %v154 = vpow.pop %v153
  %v155 = vsel %vm35, %v152, 0.0
  %v156 = vsel %vm36, %v154, 0.0
  %v157 = vsel %vm73, %v155, 0.0
  %158 = vadd.xlane.f32.xlu0 %v157
  %v159 = vpop.xlane.xlu0 %158
  %v160 = vsel %vm73, %v156, 0.0
  %161 = vadd.xlane.f32.xlu0 %v160
  %v162 = vpop.xlane.xlu0 %161
  %v163 = vmax.f32 %v159, 1e-20
  %v164 = vmax.f32 %v162, 1e-20
  %v165 = vrcp.pop %v163
  %v166 = vrcp.pop %v164
  %v167 = vmul.f32 %v155, %v165
  %v168 = vmul.f32 %v156, %v166
  %v170 = vsel %vm73, %v167, 0
  %v173 = vsel %vm73, %v168, 0
  %175 = vmatpush.msra.mxu0 0.0
  %176 = vmatpush.msra.mxu0 0.0
  %177 = vmatpush.msra.mxu0 0.0
  %178 = vmatpush.msra.mxu0 0.0
  %179 = vmatpush.msra.mxu0 0.0
  %180 = vmatpush.msra.mxu0 0.0
  %181 = vmatpush.msra.mxu0 0.0
  %182 = vmatpush.msra.mxu0 0.0
  %183 = vmatpush.msra.mxu0 0.0
  %184 = vmatpush.msra.mxu0 0.0
  %185 = vmatpush.msra.mxu0 0.0
  %186 = vmatpush.msra.mxu0 0.0
  %187 = vmatpush.msra.mxu0 0.0
  %188 = vmatpush.msra.mxu0 0.0
  %189 = vmatpush.msra.mxu0 %v65
  %190 = vmatpush.msra.mxu0 %v62
  %191 = vmatmul.f32.gmra.mxu0 %v170
  %v192 = vpop.f32.mrf.mxu0
  %v193 = vadd.f32 0.0, %v192
  %194 = vmatmul.f32.gmra.mxu0 %v173
  %v195 = vpop.f32.mrf.mxu0
  %v196 = vadd.f32 0.0, %v195
  %197 = vdwg.mxu0
  %vm198 = vcmp.gt.f32.partialorder %v193, 0.0
  %vm199 = vcmp.gt.f32.partialorder %v196, 0.0
  %v200 = vmin.f32 %v193, 0.0
  %v201 = vmin.f32 %v196, 0.0
  %v202 = vmul.f32 %v200, 1.442695
  %v203 = vpow.pop %v202
  %v204 = vmul.f32 %v201, 1.442695
  %v205 = vpow.pop %v204
  %v206 = vsub.f32 %v203, 1.0
  %v207 = vsub.f32 %v205, 1.0
  %v208 = vsel %vm198, %v193, %v206
  %v209 = vsel %vm199, %v196, %v207
  %v211 = vsel %vm73, %v208, 0
  %v214 = vsel %vm73, %v209, 0
  %216 = vmatpush.msra.mxu0 0.0
  %217 = vmatpush.msra.mxu0 0.0
  %218 = vmatpush.msra.mxu0 0.0
  %219 = vmatpush.msra.mxu0 0.0
  %220 = vmatpush.msra.mxu0 0.0
  %221 = vmatpush.msra.mxu0 0.0
  %222 = vmatpush.msra.mxu0 0.0
  %223 = vmatpush.msra.mxu0 0.0
  %224 = vmatpush.msra.mxu0 0.0
  %225 = vmatpush.msra.mxu0 0.0
  %226 = vmatpush.msra.mxu0 0.0
  %227 = vmatpush.msra.mxu0 0.0
  %228 = vmatpush.msra.mxu0 0.0
  %229 = vmatpush.msra.mxu0 0.0
  %230 = vmatpush.msra.mxu0 %v30
  %231 = vmatpush.msra.mxu0 %v29
  %232 = vmatmul.f32.gmra.mxu0 %v211
  %v233 = vpop.f32.mrf.mxu0
  %v234 = vadd.f32 0.0, %v233
  %235 = vmatmul.f32.gmra.mxu0 %v214
  %v236 = vpop.f32.mrf.mxu0
  %v237 = vadd.f32 0.0, %v236
  %238 = vdwg.mxu0
  %vm239 = vcmask 64512
  %v241 = vsel %vm239, %v234, 0
  %v244 = vsel %vm239, %v237, 0
  %v247 = vsel %vm239, %v29, 0
  %v250 = vsel %vm239, %v30, 0
  %252 = vmatpush.xpose.msra.mxu0 0.0
  %253 = vmatpush.xpose.msra.mxu0 0.0
  %254 = vmatpush.xpose.msra.mxu0 0.0
  %255 = vmatpush.xpose.msra.mxu0 0.0
  %256 = vmatpush.xpose.msra.mxu0 0.0
  %257 = vmatpush.xpose.msra.mxu0 0.0
  %258 = vmatpush.xpose.msra.mxu0 0.0
  %259 = vmatpush.xpose.msra.mxu0 0.0
  %260 = vmatpush.xpose.msra.mxu0 0.0
  %261 = vmatpush.xpose.msra.mxu0 0.0
  %262 = vmatpush.xpose.msra.mxu0 0.0
  %263 = vmatpush.xpose.msra.mxu0 0.0
  %264 = vmatpush.xpose.msra.mxu0 0.0
  %265 = vmatpush.xpose.msra.mxu0 0.0
  %266 = vmatpush.xpose.msra.mxu0 %v250
  %267 = vmatpush.xpose.msra.mxu0 %v247
  %268 = vmatmul.f32.gmra.mxu0 %v241
  %v269 = vpop.f32.mrf.mxu0
  %v270 = vadd.f32 0.0, %v269
  %271 = vmatmul.f32.gmra.mxu0 %v244
  %v272 = vpop.f32.mrf.mxu0
  %v273 = vadd.f32 0.0, %v272
  %274 = vdwg.mxu0
  %275 = vmatpush.msra.mxu0 0.0
  %276 = vmatpush.msra.mxu0 0.0
  %277 = vmatpush.msra.mxu0 0.0
  %278 = vmatpush.msra.mxu0 0.0
  %279 = vmatpush.msra.mxu0 0.0
  %280 = vmatpush.msra.mxu0 0.0
  %281 = vmatpush.msra.mxu0 0.0
  %282 = vmatpush.msra.mxu0 0.0
  %283 = vmatpush.msra.mxu0 0.0
  %284 = vmatpush.msra.mxu0 0.0
  %285 = vmatpush.msra.mxu0 0.0
  %286 = vmatpush.msra.mxu0 0.0
  %287 = vmatpush.msra.mxu0 0.0
  %288 = vmatpush.msra.mxu0 0.0
  %289 = vmatpush.msra.mxu0 %v273
  %290 = vmatpush.msra.mxu0 %v270
  %291 = vmatmul.f32.gmra.mxu0 %v170
  %v292 = vpop.f32.mrf.mxu0
  %v293 = vadd.f32 0.0, %v292
  %294 = vmatmul.f32.gmra.mxu0 %v173
  %v295 = vpop.f32.mrf.mxu0
  %v296 = vadd.f32 0.0, %v295
  %297 = vdwg.mxu0
  %vm298 = vcmp.gt.f32.partialorder %v293, 0.0
  %vm299 = vcmp.gt.f32.partialorder %v296, 0.0
  %v300 = vmin.f32 %v293, 0.0
  %v301 = vmin.f32 %v296, 0.0
  %v302 = vmul.f32 %v300, 1.442695
  %v303 = vpow.pop %v302
  %v304 = vmul.f32 %v301, 1.442695
  %v305 = vpow.pop %v304
  %v306 = vsub.f32 %v303, 1.0
  %v307 = vsub.f32 %v305, 1.0
  %v308 = vsel %vm298, %v293, %v306
  %v309 = vsel %vm299, %v296, %v307
  %v311 = vsel %vm73, %v308, 0
  %v314 = vsel %vm73, %v309, 0
  %v317 = vsel %vm73, %v25, 0
  %v320 = vsel %vm73, %v26, 0
  %v323 = vsel %vm73, %v27, 0
  %v326 = vsel %vm73, %v28, 0
  %328 = vmatpush.xpose.msra.mxu0 0.0
  %329 = vmatpush.xpose.msra.mxu0 0.0
  %330 = vmatpush.xpose.msra.mxu0 0.0
  %331 = vmatpush.xpose.msra.mxu0 0.0
  %332 = vmatpush.xpose.msra.mxu0 0.0
  %333 = vmatpush.xpose.msra.mxu0 0.0
  %334 = vmatpush.xpose.msra.mxu0 0.0
  %335 = vmatpush.xpose.msra.mxu0 0.0
  %336 = vmatpush.xpose.msra.mxu0 0.0
  %337 = vmatpush.xpose.msra.mxu0 0.0
  %338 = vmatpush.xpose.msra.mxu0 0.0
  %339 = vmatpush.xpose.msra.mxu0 0.0
  %340 = vmatpush.xpose.msra.mxu0 %v326
  %341 = vmatpush.xpose.msra.mxu0 %v323
  %342 = vmatpush.xpose.msra.mxu0 %v320
  %343 = vmatpush.xpose.msra.mxu0 %v317
  %344 = vmatmul.f32.gmra.mxu0 %v311
  %v345 = vpop.f32.mrf.mxu0
  %v346 = vadd.f32 0.0, %v345
  %347 = vmatmul.f32.gmra.mxu0 %v314
  %v348 = vpop.f32.mrf.mxu0
  %v349 = vadd.f32 0.0, %v348
  %350 = vdwg.mxu0
  %353 = vrot.lane.b32.xlu0 %v346, 8
  %v354 = vpop.permute.xlu0 %353
  %355 = vrot.lane.b32.xlu0 %v349, 8
  %v356 = vpop.permute.xlu0 %355
  %v359 = vsel %vm239, %v234, %v354
  %v360 = vsel %vm239, %v237, %v356
  %vm361 = vcmask 326656
  %v362 = vsel %vm361, %v359, 0.0
  %v363 = vsel %vm361, %v360, 0.0
  %364 = vst [vmem:[%s6] sm:$0xff] %v362
  %365 = vst [vmem:[%s6 + $0x8] sm:$0xff] %v363
  // Predicated region
  $region26: #{stagate_forward.1} parent=0 // pred_check
    _
  $region27: #{stagate_forward.1} parent=0 // pred_check_branch
    %367 = sbr.rel (0) target = $region29
  $region28: #{stagate_forward.1} parent=0 // pred_region
    _
  $region29: #{stagate_forward.1} parent=0 // pred_fallthru
    _
  // Predicated region
  $region30: #{stagate_forward.1} parent=0 // pred_check
    _
  $region31: #{stagate_forward.1} parent=0 // pred_check_branch
    %369 = sbr.rel (0) target = $region33
  $region32: #{stagate_forward.1} parent=0 // pred_region
    _
  $region33: #{stagate_forward.1} parent=0 // pred_fallthru
    _

</llo_original>
